<compile_context>
chip_gen: v5e
topology: v5e:2x2
jax: 0.10.0
libtpu: 0.0.40
codegen_flags: <defaults>
</compile_context>

<pallas_src>
import jax
import jax.numpy as jnp
from jax.experimental import pallas as pl
from jax.experimental.pallas import tpu as pltpu


def _feat_vpu(h, wt_ref):
    """(H @ W)^T in transposed layout, computed on the VPU.

    h:      [F_in, N]   activation values (nodes on lanes).
    wt_ref: VMEM ref,   [F_out, F_in]  (W transposed).
    Returns [F_out, N].

    K = F_in is only 2 or 4, so instead of a >96%-padded MXU matmul this is
    K rank-1 broadcast FMAs: wt[:, i:i+1] * h[i:i+1, :].
    """
    wt = wt_ref[...]
    f_in = wt.shape[1]
    acc = wt[:, 0:1] * h[0:1, :]
    for i in range(1, f_in):
        acc = acc + wt[:, i : i + 1] * h[i : i + 1, :]
    return acc


def gcn_kernel(a_ref, x_ref,
               wt1_ref, b1_ref, wt2_ref, b2_ref, wt3_ref, b3_ref,
               o_ref):
    """One graph per grid step; everything VMEM-resident.

    a_ref:   [1, N, N]      (A + I)^T, unnormalized 0/1 adjacency (transposed).
    x_ref:   [1, F_in, N]   node features, transposed (lane-dense).
    wt*_ref: [F_out, F_in]  layer weights, transposed.
    b*_ref:  [F_out, 1]     layer biases (column -> lane broadcast).
    o_ref:   [1, 2, N]      output, transposed (lane-dense store).
    """
    at = a_ref[0]                                     # [N, N]

    # Normalization folded into the kernel: deg_d = sum_s At[s, d]
    # (in-degree incl. self-loop). Scale the small [F, N] activations
    # instead of the big N x N matrix.
    deg = jnp.sum(at, axis=0, keepdims=True)          # [1, N]
    dinv = jax.lax.rsqrt(deg)                         # deg >= 1 -> safe

    def gcn_layer(h, wt_ref, b_ref):
        hw = _feat_vpu(h, wt_ref)                     # (X W)^T       [F_out, N]  (VPU)
        hw = hw * dinv                                # source-side D^{-1/2}
        agg = jnp.dot(hw, at,                         # aggregation   [F_out, N]  (MXU)
                      preferred_element_type=jnp.float32)
        return agg * dinv + b_ref[...]                # dest-side D^{-1/2} + bias

    h = x_ref[0]                                      # [F_in, N]
    h = jnp.tanh(gcn_layer(h, wt1_ref, b1_ref))       # GCNConv(2 -> 4) + tanh
    h = jnp.tanh(gcn_layer(h, wt2_ref, b2_ref))       # GCNConv(4 -> 4) + tanh
    h = gcn_layer(h, wt3_ref, b3_ref)                 # GCNConv(4 -> 2)
    o_ref[0] = h.astype(o_ref.dtype)


def gcn_forward_batched(x, edge_index, params):
    """B independent graphs in one pallas_call.

    x:          [B, N, 2]  float32 node features.
    edge_index: [B, 2, E]  int32 edge lists (row 0 = src, row 1 = dst).
    Returns     [B, N, 2]  float32.
    """
    B, N, f_in = x.shape
    w1, b1, w2, b2, w3, b3 = params
    f_out = w3.shape[1]

    # --- glue: dense transposed 0/1 adjacency with self-loops (no extra N^2
    #     normalization pass; normalization happens inside the kernel). ---
    # NOTE: duplicate edges accumulate weight > 1; this matches PyG GCNConv
    # only for deduplicated, self-loop-free edge lists (same as before).
    def build_at(ei):
        src, dst = ei[0], ei[1]
        loops = jnp.arange(N, dtype=ei.dtype)
        s = jnp.concatenate([src, loops])
        d = jnp.concatenate([dst, loops])
        return jnp.zeros((N, N), jnp.float32).at[s, d].add(1.0)   # At[s, d]

    at = jax.vmap(build_at)(edge_index)                            # [B, N, N]
    x_t = jnp.transpose(x, (0, 2, 1)).astype(jnp.float32)          # [B, 2, N]

    vmem = lambda: pl.BlockSpec(memory_space=pltpu.MemorySpace.VMEM)  # whole-array resident

    out_t = pl.pallas_call(
        gcn_kernel,
        grid=(B,),
        in_specs=[
            pl.BlockSpec((1, N, N), lambda b: (b, 0, 0)),          # A^T (pipelined over B)
            pl.BlockSpec((1, f_in, N), lambda b: (b, 0, 0)),       # X^T
            vmem(), vmem(),                                        # W1^T, b1
            vmem(), vmem(),                                        # W2^T, b2
            vmem(), vmem(),                                        # W3^T, b3
        ],
        out_specs=pl.BlockSpec((1, f_out, N), lambda b: (b, 0, 0)),
        out_shape=jax.ShapeDtypeStruct((B, f_out, N), jnp.float32),
        compiler_params=pltpu.CompilerParams(
            dimension_semantics=("parallel",),                     # graphs are independent
        ),
    )(
        at, x_t,
        w1.T.astype(jnp.float32), b1.reshape(-1, 1).astype(jnp.float32),
        w2.T.astype(jnp.float32), b2.reshape(-1, 1).astype(jnp.float32),
        w3.T.astype(jnp.float32), b3.reshape(-1, 1).astype(jnp.float32),
    )
    # Layout plumbing only: present the conventional [N, F] node-major output.
    return jnp.transpose(out_t, (0, 2, 1))                         # [B, N, 2]


def gcn_forward(x, edge_index, params):
    """Single-graph forward matching GCN.forward(x, edge_index): [N, 2] -> [N, 2]."""
    return gcn_forward_batched(x[None], edge_index[None], params)[0]


def init_params(key):
    """Deterministic synthetic parameters for GCNConv(2,4), (4,4), (4,2)."""
    ks = jax.random.split(key, 6)
    w1 = jax.random.normal(ks[0], (2, 4), jnp.float32) * 0.5
    b1 = jax.random.normal(ks[1], (4,), jnp.float32) * 0.1
    w2 = jax.random.normal(ks[2], (4, 4), jnp.float32) * 0.5
    b2 = jax.random.normal(ks[3], (4,), jnp.float32) * 0.1
    w3 = jax.random.normal(ks[4], (4, 2), jnp.float32) * 0.5
    b3 = jax.random.normal(ks[5], (2,), jnp.float32) * 0.1
    return (w1, b1, w2, b2, w3, b3)


def gcn_reference(x, edge_index, params):
    """Pure-JAX dense reference (PyG GCNConv default semantics), single graph."""
    N = x.shape[0]
    src, dst = edge_index[0], edge_index[1]
    A = jnp.zeros((N, N), jnp.float32).at[dst, src].add(1.0) + jnp.eye(N, dtype=jnp.float32)
    dinv = jax.lax.rsqrt(A.sum(axis=1))
    ah = dinv[:, None] * A * dinv[None, :]
    w1, b1, w2, b2, w3, b3 = params
    dot = lambda a, b: jnp.dot(a, b, precision=jax.lax.Precision.HIGHEST)
    h = jnp.tanh(dot(ah, dot(x, w1)) + b1[None, :])
    h = jnp.tanh(dot(ah, dot(h, w2)) + b2[None, :])
    h = dot(ah, dot(h, w3)) + b3[None, :]
    return h


if __name__ == "__main__":
    key = jax.random.PRNGKey(0)
    k_x, k_p = jax.random.split(key)

    B, N = 4, 128          # N = 128 -> lane-dense [F, N] stores inside the kernel

    # Deterministic synthetic graphs: bidirectional ring + per-graph skip-k chords
    # (no duplicate edges, no self-loops).
    nodes = jnp.arange(N, dtype=jnp.int32)

    def graph_edges(k):
        ring_d = (nodes + 1) % N
        chord_d = (nodes + k) % N
        src = jnp.concatenate([nodes, ring_d, nodes, chord_d])
        dst = jnp.concatenate([ring_d, nodes, chord_d, nodes])
        return jnp.stack([src, dst], axis=0)                       # [2, 4N]

    edge_index = jnp.stack([graph_edges(k) for k in (2, 3, 5, 7)], axis=0)  # [B, 2, 512]
    x = jax.random.normal(k_x, (B, N, 2), jnp.float32)
    params = init_params(k_p)

    # Batched forward (the amortized path).
    out = jax.block_until_ready(gcn_forward_batched(x, edge_index, params))
    assert out.shape == (B, N, 2) and out.dtype == jnp.float32

    # Single-graph API matching the original module's forward signature.
    out0 = jax.block_until_ready(gcn_forward(x[0], edge_index[0], params))
    assert out0.shape == (N, 2)

    # Numerical check against a pure-JAX dense reference.
    ref = jnp.stack([gcn_reference(x[b], edge_index[b], params) for b in range(B)])
    assert jnp.allclose(out, ref, atol=1e-3, rtol=1e-3), float(jnp.max(jnp.abs(out - ref)))
    assert jnp.allclose(out0, ref[0], atol=1e-3, rtol=1e-3)

    print("KERNEL_OK")
</pallas_src>

<mosaic_0001>
module attributes {stable_mosaic.version = 11 : i64} {
  func.func @gcn_kernel(%arg0: i32, %arg1: memref<1x128x128xf32, #tpu.memory_space<vmem>>, %arg2: memref<1x2x128xf32, #tpu.memory_space<vmem>>, %arg3: memref<4x2xf32, #tpu.memory_space<vmem>>, %arg4: memref<4x1xf32, #tpu.memory_space<vmem>>, %arg5: memref<4x4xf32, #tpu.memory_space<vmem>>, %arg6: memref<4x1xf32, #tpu.memory_space<vmem>>, %arg7: memref<2x4xf32, #tpu.memory_space<vmem>>, %arg8: memref<2x1xf32, #tpu.memory_space<vmem>>, %arg9: memref<1x2x128xf32, #tpu.memory_space<vmem>>) attributes {dimension_semantics = [#tpu.dimension_semantics<parallel>], iteration_bounds = array<i64: 4>, scalar_prefetch = 0 : i64, scratch_operands = 0 : i64, tpu.core_type = #tpu.core_type<tc>, window_params = [{transform_indices = @transform_0, window_bounds = array<i64: 1, 128, 128>}, {transform_indices = @transform_1, window_bounds = array<i64: 1, 2, 128>}, {pipeline_mode = #tpu.pipeline_mode<synchronous>, transform_indices = @transform_2, window_bounds = array<i64: 4, 2>}, {pipeline_mode = #tpu.pipeline_mode<synchronous>, transform_indices = @transform_3, window_bounds = array<i64: 4, 1>}, {pipeline_mode = #tpu.pipeline_mode<synchronous>, transform_indices = @transform_4, window_bounds = array<i64: 4, 4>}, {pipeline_mode = #tpu.pipeline_mode<synchronous>, transform_indices = @transform_5, window_bounds = array<i64: 4, 1>}, {pipeline_mode = #tpu.pipeline_mode<synchronous>, transform_indices = @transform_6, window_bounds = array<i64: 2, 4>}, {pipeline_mode = #tpu.pipeline_mode<synchronous>, transform_indices = @transform_7, window_bounds = array<i64: 2, 1>}, {transform_indices = @transform_8, window_bounds = array<i64: 1, 2, 128>}]} {
    %c0 = arith.constant 0 : index
    %c0_0 = arith.constant 0 : index
    %c0_1 = arith.constant 0 : index
    %0 = vector.load %arg1[%c0, %c0_0, %c0_1] : memref<1x128x128xf32, #tpu.memory_space<vmem>>, vector<1x128x128xf32>
    %1 = vector.shape_cast %0 : vector<1x128x128xf32> to vector<128x128xf32>
    %cst = arith.constant dense<0.000000e+00> : vector<128xf32>
    %2 = vector.multi_reduction <add>, %1, %cst [0] : vector<128x128xf32> to vector<128xf32>
    %3 = vector.shape_cast %2 : vector<128xf32> to vector<1x128xf32>
    %4 = math.rsqrt %3 : vector<1x128xf32>
    %c0_2 = arith.constant 0 : index
    %c0_3 = arith.constant 0 : index
    %c0_4 = arith.constant 0 : index
    %5 = vector.load %arg2[%c0_2, %c0_3, %c0_4] : memref<1x2x128xf32, #tpu.memory_space<vmem>>, vector<1x2x128xf32>
    %6 = vector.shape_cast %5 : vector<1x2x128xf32> to vector<2x128xf32>
    %c0_5 = arith.constant 0 : index
    %c0_6 = arith.constant 0 : index
    %7 = vector.load %arg3[%c0_5, %c0_6] : memref<4x2xf32, #tpu.memory_space<vmem>>, vector<4x2xf32>
    %8 = vector.extract_strided_slice %7 {offsets = [0, 0], sizes = [4, 1], strides = [1, 1]} : vector<4x2xf32> to vector<4x1xf32>
    %9 = vector.extract_strided_slice %6 {offsets = [0, 0], sizes = [1, 128], strides = [1, 1]} : vector<2x128xf32> to vector<1x128xf32>
    %10 = vector.broadcast %8 : vector<4x1xf32> to vector<4x128xf32>
    %11 = vector.broadcast %9 : vector<1x128xf32> to vector<4x128xf32>
    %12 = arith.mulf %10, %11 : vector<4x128xf32>
    %13 = vector.extract_strided_slice %7 {offsets = [0, 1], sizes = [4, 1], strides = [1, 1]} : vector<4x2xf32> to vector<4x1xf32>
    %14 = vector.extract_strided_slice %6 {offsets = [1, 0], sizes = [1, 128], strides = [1, 1]} : vector<2x128xf32> to vector<1x128xf32>
    %15 = vector.broadcast %13 : vector<4x1xf32> to vector<4x128xf32>
    %16 = vector.broadcast %14 : vector<1x128xf32> to vector<4x128xf32>
    %17 = arith.mulf %15, %16 : vector<4x128xf32>
    %18 = arith.addf %12, %17 : vector<4x128xf32>
    %19 = vector.broadcast %4 : vector<1x128xf32> to vector<4x128xf32>
    %20 = arith.mulf %18, %19 : vector<4x128xf32>
    %cst_7 = arith.constant dense<0.000000e+00> : vector<4x128xf32>
    %21 = tpu.matmul %20, %1, %cst_7 {dimension_numbers = #tpu.dot_dimension_numbers<[1], [0], [0], [1], [0, 0, 1, 1], [], []>} : vector<4x128xf32>, vector<128x128xf32>, vector<4x128xf32> -> vector<4x128xf32>
    %22 = vector.broadcast %4 : vector<1x128xf32> to vector<4x128xf32>
    %23 = arith.mulf %21, %22 : vector<4x128xf32>
    %c0_8 = arith.constant 0 : index
    %c0_9 = arith.constant 0 : index
    %24 = vector.load %arg4[%c0_8, %c0_9] : memref<4x1xf32, #tpu.memory_space<vmem>>, vector<4x1xf32>
    %25 = vector.broadcast %24 : vector<4x1xf32> to vector<4x128xf32>
    %26 = arith.addf %23, %25 : vector<4x128xf32>
    %27 = math.tanh %26 : vector<4x128xf32>
    %c0_10 = arith.constant 0 : index
    %c0_11 = arith.constant 0 : index
    %28 = vector.load %arg5[%c0_10, %c0_11] : memref<4x4xf32, #tpu.memory_space<vmem>>, vector<4x4xf32>
    %29 = vector.extract_strided_slice %28 {offsets = [0, 0], sizes = [4, 1], strides = [1, 1]} : vector<4x4xf32> to vector<4x1xf32>
    %30 = vector.extract_strided_slice %27 {offsets = [0, 0], sizes = [1, 128], strides = [1, 1]} : vector<4x128xf32> to vector<1x128xf32>
    %31 = vector.broadcast %29 : vector<4x1xf32> to vector<4x128xf32>
    %32 = vector.broadcast %30 : vector<1x128xf32> to vector<4x128xf32>
    %33 = arith.mulf %31, %32 : vector<4x128xf32>
    %34 = vector.extract_strided_slice %28 {offsets = [0, 1], sizes = [4, 1], strides = [1, 1]} : vector<4x4xf32> to vector<4x1xf32>
    %35 = vector.extract_strided_slice %27 {offsets = [1, 0], sizes = [1, 128], strides = [1, 1]} : vector<4x128xf32> to vector<1x128xf32>
    %36 = vector.broadcast %34 : vector<4x1xf32> to vector<4x128xf32>
    %37 = vector.broadcast %35 : vector<1x128xf32> to vector<4x128xf32>
    %38 = arith.mulf %36, %37 : vector<4x128xf32>
    %39 = arith.addf %33, %38 : vector<4x128xf32>
    %40 = vector.extract_strided_slice %28 {offsets = [0, 2], sizes = [4, 1], strides = [1, 1]} : vector<4x4xf32> to vector<4x1xf32>
    %41 = vector.extract_strided_slice %27 {offsets = [2, 0], sizes = [1, 128], strides = [1, 1]} : vector<4x128xf32> to vector<1x128xf32>
    %42 = vector.broadcast %40 : vector<4x1xf32> to vector<4x128xf32>
    %43 = vector.broadcast %41 : vector<1x128xf32> to vector<4x128xf32>
    %44 = arith.mulf %42, %43 : vector<4x128xf32>
    %45 = arith.addf %39, %44 : vector<4x128xf32>
    %46 = vector.extract_strided_slice %28 {offsets = [0, 3], sizes = [4, 1], strides = [1, 1]} : vector<4x4xf32> to vector<4x1xf32>
    %47 = vector.extract_strided_slice %27 {offsets = [3, 0], sizes = [1, 128], strides = [1, 1]} : vector<4x128xf32> to vector<1x128xf32>
    %48 = vector.broadcast %46 : vector<4x1xf32> to vector<4x128xf32>
    %49 = vector.broadcast %47 : vector<1x128xf32> to vector<4x128xf32>
    %50 = arith.mulf %48, %49 : vector<4x128xf32>
    %51 = arith.addf %45, %50 : vector<4x128xf32>
    %52 = vector.broadcast %4 : vector<1x128xf32> to vector<4x128xf32>
    %53 = arith.mulf %51, %52 : vector<4x128xf32>
    %cst_12 = arith.constant dense<0.000000e+00> : vector<4x128xf32>
    %54 = tpu.matmul %53, %1, %cst_12 {dimension_numbers = #tpu.dot_dimension_numbers<[1], [0], [0], [1], [0, 0, 1, 1], [], []>} : vector<4x128xf32>, vector<128x128xf32>, vector<4x128xf32> -> vector<4x128xf32>
    %55 = vector.broadcast %4 : vector<1x128xf32> to vector<4x128xf32>
    %56 = arith.mulf %54, %55 : vector<4x128xf32>
    %c0_13 = arith.constant 0 : index
    %c0_14 = arith.constant 0 : index
    %57 = vector.load %arg6[%c0_13, %c0_14] : memref<4x1xf32, #tpu.memory_space<vmem>>, vector<4x1xf32>
    %58 = vector.broadcast %57 : vector<4x1xf32> to vector<4x128xf32>
    %59 = arith.addf %56, %58 : vector<4x128xf32>
    %60 = math.tanh %59 : vector<4x128xf32>
    %c0_15 = arith.constant 0 : index
    %c0_16 = arith.constant 0 : index
    %61 = vector.load %arg7[%c0_15, %c0_16] : memref<2x4xf32, #tpu.memory_space<vmem>>, vector<2x4xf32>
    %62 = vector.extract_strided_slice %61 {offsets = [0, 0], sizes = [2, 1], strides = [1, 1]} : vector<2x4xf32> to vector<2x1xf32>
    %63 = vector.extract_strided_slice %60 {offsets = [0, 0], sizes = [1, 128], strides = [1, 1]} : vector<4x128xf32> to vector<1x128xf32>
    %64 = vector.broadcast %62 : vector<2x1xf32> to vector<2x128xf32>
    %65 = vector.broadcast %63 : vector<1x128xf32> to vector<2x128xf32>
    %66 = arith.mulf %64, %65 : vector<2x128xf32>
    %67 = vector.extract_strided_slice %61 {offsets = [0, 1], sizes = [2, 1], strides = [1, 1]} : vector<2x4xf32> to vector<2x1xf32>
    %68 = vector.extract_strided_slice %60 {offsets = [1, 0], sizes = [1, 128], strides = [1, 1]} : vector<4x128xf32> to vector<1x128xf32>
    %69 = vector.broadcast %67 : vector<2x1xf32> to vector<2x128xf32>
    %70 = vector.broadcast %68 : vector<1x128xf32> to vector<2x128xf32>
    %71 = arith.mulf %69, %70 : vector<2x128xf32>
    %72 = arith.addf %66, %71 : vector<2x128xf32>
    %73 = vector.extract_strided_slice %61 {offsets = [0, 2], sizes = [2, 1], strides = [1, 1]} : vector<2x4xf32> to vector<2x1xf32>
    %74 = vector.extract_strided_slice %60 {offsets = [2, 0], sizes = [1, 128], strides = [1, 1]} : vector<4x128xf32> to vector<1x128xf32>
    %75 = vector.broadcast %73 : vector<2x1xf32> to vector<2x128xf32>
    %76 = vector.broadcast %74 : vector<1x128xf32> to vector<2x128xf32>
    %77 = arith.mulf %75, %76 : vector<2x128xf32>
    %78 = arith.addf %72, %77 : vector<2x128xf32>
    %79 = vector.extract_strided_slice %61 {offsets = [0, 3], sizes = [2, 1], strides = [1, 1]} : vector<2x4xf32> to vector<2x1xf32>
    %80 = vector.extract_strided_slice %60 {offsets = [3, 0], sizes = [1, 128], strides = [1, 1]} : vector<4x128xf32> to vector<1x128xf32>
    %81 = vector.broadcast %79 : vector<2x1xf32> to vector<2x128xf32>
    %82 = vector.broadcast %80 : vector<1x128xf32> to vector<2x128xf32>
    %83 = arith.mulf %81, %82 : vector<2x128xf32>
    %84 = arith.addf %78, %83 : vector<2x128xf32>
    %85 = vector.broadcast %4 : vector<1x128xf32> to vector<2x128xf32>
    %86 = arith.mulf %84, %85 : vector<2x128xf32>
    %cst_17 = arith.constant dense<0.000000e+00> : vector<2x128xf32>
    %87 = tpu.matmul %86, %1, %cst_17 {dimension_numbers = #tpu.dot_dimension_numbers<[1], [0], [0], [1], [0, 0, 1, 1], [], []>} : vector<2x128xf32>, vector<128x128xf32>, vector<2x128xf32> -> vector<2x128xf32>
    %88 = vector.broadcast %4 : vector<1x128xf32> to vector<2x128xf32>
    %89 = arith.mulf %87, %88 : vector<2x128xf32>
    %c0_18 = arith.constant 0 : index
    %c0_19 = arith.constant 0 : index
    %90 = vector.load %arg8[%c0_18, %c0_19] : memref<2x1xf32, #tpu.memory_space<vmem>>, vector<2x1xf32>
    %91 = vector.broadcast %90 : vector<2x1xf32> to vector<2x128xf32>
    %92 = arith.addf %89, %91 : vector<2x128xf32>
    %c0_20 = arith.constant 0 : index
    %c0_21 = arith.constant 0 : index
    %c0_22 = arith.constant 0 : index
    %93 = vector.load %arg9[%c0_20, %c0_21, %c0_22] : memref<1x2x128xf32, #tpu.memory_space<vmem>>, vector<1x2x128xf32>
    %94 = vector.shape_cast %93 : vector<1x2x128xf32> to vector<2x128xf32>
    %95 = vector.shape_cast %92 : vector<2x128xf32> to vector<1x2x128xf32>
    tpu.vector_store %arg9[%c0_20, %c0_21, %c0_22], %95 {strides = array<i32>} : memref<1x2x128xf32, #tpu.memory_space<vmem>>, vector<1x2x128xf32>,
    return
  }
  func.func @transform_0(%arg0: i32) -> (i32, i32, i32) {
    %c0_i32 = arith.constant 0 : i32
    %c0_i32_0 = arith.constant 0 : i32
    %c0_i32_1 = arith.constant 0 : i32
    return %arg0, %c0_i32, %c0_i32_0 : i32, i32, i32
  }
  func.func @transform_1(%arg0: i32) -> (i32, i32, i32) {
    %c0_i32 = arith.constant 0 : i32
    %c0_i32_0 = arith.constant 0 : i32
    %c0_i32_1 = arith.constant 0 : i32
    return %arg0, %c0_i32, %c0_i32_0 : i32, i32, i32
  }
  func.func @transform_2(%arg0: i32) -> (i32, i32) {
    %c0_i32 = arith.constant 0 : i32
    %c0_i32_0 = arith.constant 0 : i32
    %c0_i32_1 = arith.constant 0 : i32
    return %c0_i32, %c0_i32_0 : i32, i32
  }
  func.func @transform_3(%arg0: i32) -> (i32, i32) {
    %c0_i32 = arith.constant 0 : i32
    %c0_i32_0 = arith.constant 0 : i32
    %c0_i32_1 = arith.constant 0 : i32
    return %c0_i32, %c0_i32_0 : i32, i32
  }
  func.func @transform_4(%arg0: i32) -> (i32, i32) {
    %c0_i32 = arith.constant 0 : i32
    %c0_i32_0 = arith.constant 0 : i32
    %c0_i32_1 = arith.constant 0 : i32
    return %c0_i32, %c0_i32_0 : i32, i32
  }
  func.func @transform_5(%arg0: i32) -> (i32, i32) {
    %c0_i32 = arith.constant 0 : i32
    %c0_i32_0 = arith.constant 0 : i32
    %c0_i32_1 = arith.constant 0 : i32
    return %c0_i32, %c0_i32_0 : i32, i32
  }
  func.func @transform_6(%arg0: i32) -> (i32, i32) {
    %c0_i32 = arith.constant 0 : i32
    %c0_i32_0 = arith.constant 0 : i32
    %c0_i32_1 = arith.constant 0 : i32
    return %c0_i32, %c0_i32_0 : i32, i32
  }
  func.func @transform_7(%arg0: i32) -> (i32, i32) {
    %c0_i32 = arith.constant 0 : i32
    %c0_i32_0 = arith.constant 0 : i32
    %c0_i32_1 = arith.constant 0 : i32
    return %c0_i32, %c0_i32_0 : i32, i32
  }
  func.func @transform_8(%arg0: i32) -> (i32, i32, i32) {
    %c0_i32 = arith.constant 0 : i32
    %c0_i32_0 = arith.constant 0 : i32
    %c0_i32_1 = arith.constant 0 : i32
    return %arg0, %c0_i32, %c0_i32_0 : i32, i32, i32
  }
}

</mosaic_0001>

<llo_original>
// kernel: tpu_custom_call.1
$region0: #{tpu_custom_call.1}
  #allocation0 [shape = 'u32[]', space=smem, size = 0x4, offset = 0x4, fixed_abs, tag = 'smem constant byte address 0x4 - core index']
  #allocation1 [shape = 'u32[72,128]{1,0:T(1,128)}', space=vmem, size = 0x9000, scoped, tag = 'internal scratch']
  %s0 = inlined_call_operand.hbm [shape: f32[4,128,128], index: 0, kind: input, shape index: {}]
  %s1 = inlined_call_operand.vmem [shape: f32[4,2,128], index: 1, kind: input, shape index: {}]
  %s2 = inlined_call_operand.vmem [shape: f32[4,2], index: 2, kind: input, shape index: {}]
  %s3 = inlined_call_operand.vmem [shape: f32[4,1], index: 3, kind: input, shape index: {}]
  %s4 = inlined_call_operand.vmem [shape: f32[4,4], index: 4, kind: input, shape index: {}]
  %s5 = inlined_call_operand.vmem [shape: f32[4,1], index: 5, kind: input, shape index: {}]
  %s6 = inlined_call_operand.vmem [shape: f32[2,4], index: 6, kind: input, shape index: {}]
  %s7 = inlined_call_operand.vmem [shape: f32[2,1], index: 7, kind: input, shape index: {}]
  %s8 = inlined_call_operand.hbm [shape: f32[4,2,128], index: 8, kind: output, shape index: {}]
  %s9 = sld [smem:[#allocation0]]
  $region69: #{tpu_custom_call.1} parent=0
    _
  %s11 = ssub.s32 1, %s9
  %s12 = scalar_select 0, %s11, %s9
  $region1: #{tpu_custom_call.1} parent=0
    #allocation2 [shape = 'u8[131072]{0}', space=vmem, size = 0x20000, scoped, tag = 'input window, operand 0']
    #allocation3 [shape = 's32[2]{0}', space=sflag, size = 0x8, scoped, tag = 'scoped memory for tpu_custom_call.1']
    #allocation4 [shape = 's32[2]{0}', space=sflag, size = 0x8, scoped, tag = 'scoped memory for tpu_custom_call.1']
    #allocation5 [shape = 'u8[2048]{0}', space=vmem, size = 0x800, scoped, tag = 'output window, operand 0']
    %13 = vsyncpa [#allocation3], 0
    %s14 = scalar_lea.sflag [#allocation3], 1
    %15 = vsyncpa %s14, 0
    %16 = vsyncpa [#allocation4], 0
    %s17 = scalar_lea.sflag [#allocation4], 1
    %18 = vsyncpa %s17, 0
    loop: start=0, step=1, limit=6
    $region2: #{tpu_custom_call.1} parent=1 // loop_pre_header
      _
    $region3: #{tpu_custom_call.1} parent=1 // loop_header
      %s20 = sphi 0, %s24
      %p21 = scmp.ge.s32.totalorder %s20, 6
      %s30 = sphi 0, %s32
      %s33 = sphi 0, %s30
      %s34 = sphi 0, %s33
      %s50 = sphi 0, %s34
      %s56 = sphi 0, %s58
      %s59 = sphi 0, %s56
      %s60 = sphi 0, %s59
      %s76 = sphi 0, %s60
      %s80 = sphi 0, %s80
      %s82 = sphi 0, %s80
      %s83 = sphi 0, %s82
      %s97 = sphi 0, %s83
      %s101 = sphi 0, %s101
      %s103 = sphi 0, %s101
      %s104 = sphi 0, %s103
      %s118 = sphi 0, %s104
      %s122 = sphi 0, %s122
      %s124 = sphi 0, %s122
      %s125 = sphi 0, %s124
      %s139 = sphi 0, %s125
      %s143 = sphi 0, %s143
      %s145 = sphi 0, %s143
      %s146 = sphi 0, %s145
      %s160 = sphi 0, %s146
      %s164 = sphi 0, %s164
      %s166 = sphi 0, %s164
      %s167 = sphi 0, %s166
      %s181 = sphi 0, %s167
      %s185 = sphi 0, %s185
      %s187 = sphi 0, %s185
      %s188 = sphi 0, %s187
      %s202 = sphi 0, %s188
      %s208 = sphi 0, %s210
      %s211 = sphi 0, %s208
      %s212 = sphi 0, %s211
      %s228 = sphi 0, %s212
    $region4: #{tpu_custom_call.1} parent=1 // loop_header_branch
      %23 = sbr.rel (%p21) target = $region8
    $region5: #{tpu_custom_call.1} parent=1 // loop_body
      %s25 = ssub.s32 %s20, 1
      %s26 = ssub.s32 %s20, 2
      %s27 = sadd.s32 %s20, 1
      %s28 = ssub.s32 %s20, %s27
      %p29 = scmp.eq.s32.totalorder %s28, 0
      %s31 = sadd.s32 %s30, 1
      %s32 = scalar_select %p29, %s30, %s31
      %p35 = pneg %p29
      %p36 = scmp.eq.s32.totalorder %s20, 3
      %p37 = por %p35, %p36
      %p38 = scmp.ne.s32.totalorder %s30, %s33
      %p39 = scmp.eq.s32.totalorder %s20, 0
      %p40 = por %p38, %p39
      %p41 = scmp.ne.s32.totalorder %s30, %s33
      %p42 = scmp.eq.s32.totalorder %s25, 3
      %p43 = por %p41, %p42
      %p44 = scmp.ne.s32.totalorder %s33, %s34
      %p45 = scmp.eq.s32.totalorder %s25, 0
      %p46 = por %p44, %p45
      %p47 = scmp.ne.s32.totalorder %s33, %s34
      %p48 = scmp.eq.s32.totalorder %s26, 3
      %p49 = por %p47, %p48
      %p51 = scmp.ne.s32.totalorder %s34, %s50
      %p52 = scmp.eq.s32.totalorder %s26, 0
      %p53 = por %p51, %p52
      %s54 = ssub.s32 %s20, %s27
      %p55 = scmp.eq.s32.totalorder %s54, 0
      %s57 = sadd.s32 %s56, 1
      %s58 = scalar_select %p55, %s56, %s57
      %p61 = pneg %p55
      %p62 = scmp.eq.s32.totalorder %s20, 3
      %p63 = por %p61, %p62
      %p64 = scmp.ne.s32.totalorder %s56, %s59
      %p65 = scmp.eq.s32.totalorder %s20, 0
      %p66 = por %p64, %p65
      %p67 = scmp.ne.s32.totalorder %s56, %s59
      %p68 = scmp.eq.s32.totalorder %s25, 3
      %p69 = por %p67, %p68
      %p70 = scmp.ne.s32.totalorder %s59, %s60
      %p71 = scmp.eq.s32.totalorder %s25, 0
      %p72 = por %p70, %p71
      %p73 = scmp.ne.s32.totalorder %s59, %s60
      %p74 = scmp.eq.s32.totalorder %s26, 3
      %p75 = por %p73, %p74
      %p77 = scmp.ne.s32.totalorder %s60, %s76
      %p78 = scmp.eq.s32.totalorder %s26, 0
      %p79 = por %p77, %p78
      %s81 = sadd.s32 %s80, 1
      %p84 = scmp.eq.s32.totalorder %s20, 3
      %p85 = scmp.ne.s32.totalorder %s80, %s82
      %p86 = scmp.eq.s32.totalorder %s20, 0
      %p87 = por %p85, %p86
      %p88 = scmp.ne.s32.totalorder %s80, %s82
      %p89 = scmp.eq.s32.totalorder %s25, 3
      %p90 = por %p88, %p89
      %p91 = scmp.ne.s32.totalorder %s82, %s83
      %p92 = scmp.eq.s32.totalorder %s25, 0
      %p93 = por %p91, %p92
      %p94 = scmp.ne.s32.totalorder %s82, %s83
      %p95 = scmp.eq.s32.totalorder %s26, 3
      %p96 = por %p94, %p95
      %p98 = scmp.ne.s32.totalorder %s83, %s97
      %p99 = scmp.eq.s32.totalorder %s26, 0
      %p100 = por %p98, %p99
      %s102 = sadd.s32 %s101, 1
      %p105 = scmp.eq.s32.totalorder %s20, 3
      %p106 = scmp.ne.s32.totalorder %s101, %s103
      %p107 = scmp.eq.s32.totalorder %s20, 0
      %p108 = por %p106, %p107
      %p109 = scmp.ne.s32.totalorder %s101, %s103
      %p110 = scmp.eq.s32.totalorder %s25, 3
      %p111 = por %p109, %p110
      %p112 = scmp.ne.s32.totalorder %s103, %s104
      %p113 = scmp.eq.s32.totalorder %s25, 0
      %p114 = por %p112, %p113
      %p115 = scmp.ne.s32.totalorder %s103, %s104
      %p116 = scmp.eq.s32.totalorder %s26, 3
      %p117 = por %p115, %p116
      %p119 = scmp.ne.s32.totalorder %s104, %s118
      %p120 = scmp.eq.s32.totalorder %s26, 0
      %p121 = por %p119, %p120
      %s123 = sadd.s32 %s122, 1
      %p126 = scmp.eq.s32.totalorder %s20, 3
      %p127 = scmp.ne.s32.totalorder %s122, %s124
      %p128 = scmp.eq.s32.totalorder %s20, 0
      %p129 = por %p127, %p128
      %p130 = scmp.ne.s32.totalorder %s122, %s124
      %p131 = scmp.eq.s32.totalorder %s25, 3
      %p132 = por %p130, %p131
      %p133 = scmp.ne.s32.totalorder %s124, %s125
      %p134 = scmp.eq.s32.totalorder %s25, 0
      %p135 = por %p133, %p134
      %p136 = scmp.ne.s32.totalorder %s124, %s125
      %p137 = scmp.eq.s32.totalorder %s26, 3
      %p138 = por %p136, %p137
      %p140 = scmp.ne.s32.totalorder %s125, %s139
      %p141 = scmp.eq.s32.totalorder %s26, 0
      %p142 = por %p140, %p141
      %s144 = sadd.s32 %s143, 1
      %p147 = scmp.eq.s32.totalorder %s20, 3
      %p148 = scmp.ne.s32.totalorder %s143, %s145
      %p149 = scmp.eq.s32.totalorder %s20, 0
      %p150 = por %p148, %p149
      %p151 = scmp.ne.s32.totalorder %s143, %s145
      %p152 = scmp.eq.s32.totalorder %s25, 3
      %p153 = por %p151, %p152
      %p154 = scmp.ne.s32.totalorder %s145, %s146
      %p155 = scmp.eq.s32.totalorder %s25, 0
      %p156 = por %p154, %p155
      %p157 = scmp.ne.s32.totalorder %s145, %s146
      %p158 = scmp.eq.s32.totalorder %s26, 3
      %p159 = por %p157, %p158
      %p161 = scmp.ne.s32.totalorder %s146, %s160
      %p162 = scmp.eq.s32.totalorder %s26, 0
      %p163 = por %p161, %p162
      %s165 = sadd.s32 %s164, 1
      %p168 = scmp.eq.s32.totalorder %s20, 3
      %p169 = scmp.ne.s32.totalorder %s164, %s166
      %p170 = scmp.eq.s32.totalorder %s20, 0
      %p171 = por %p169, %p170
      %p172 = scmp.ne.s32.totalorder %s164, %s166
      %p173 = scmp.eq.s32.totalorder %s25, 3
      %p174 = por %p172, %p173
      %p175 = scmp.ne.s32.totalorder %s166, %s167
      %p176 = scmp.eq.s32.totalorder %s25, 0
      %p177 = por %p175, %p176
      %p178 = scmp.ne.s32.totalorder %s166, %s167
      %p179 = scmp.eq.s32.totalorder %s26, 3
      %p180 = por %p178, %p179
      %p182 = scmp.ne.s32.totalorder %s167, %s181
      %p183 = scmp.eq.s32.totalorder %s26, 0
      %p184 = por %p182, %p183
      %s186 = sadd.s32 %s185, 1
      %p189 = scmp.eq.s32.totalorder %s20, 3
      %p190 = scmp.ne.s32.totalorder %s185, %s187
      %p191 = scmp.eq.s32.totalorder %s20, 0
      %p192 = por %p190, %p191
      %p193 = scmp.ne.s32.totalorder %s185, %s187
      %p194 = scmp.eq.s32.totalorder %s25, 3
      %p195 = por %p193, %p194
      %p196 = scmp.ne.s32.totalorder %s187, %s188
      %p197 = scmp.eq.s32.totalorder %s25, 0
      %p198 = por %p196, %p197
      %p199 = scmp.ne.s32.totalorder %s187, %s188
      %p200 = scmp.eq.s32.totalorder %s26, 3
      %p201 = por %p199, %p200
      %p203 = scmp.ne.s32.totalorder %s188, %s202
      %p204 = scmp.eq.s32.totalorder %s26, 0
      %p205 = por %p203, %p204
      %s206 = ssub.s32 %s20, %s27
      %p207 = scmp.eq.s32.totalorder %s206, 0
      %s209 = sadd.s32 %s208, 1
      %s210 = scalar_select %p207, %s208, %s209
      %p213 = pneg %p207
      %p214 = scmp.eq.s32.totalorder %s20, 3
      %p215 = por %p213, %p214
      %p216 = scmp.ne.s32.totalorder %s208, %s211
      %p217 = scmp.eq.s32.totalorder %s20, 0
      %p218 = por %p216, %p217
      %p219 = scmp.ne.s32.totalorder %s208, %s211
      %p220 = scmp.eq.s32.totalorder %s25, 3
      %p221 = por %p219, %p220
      %p222 = scmp.ne.s32.totalorder %s211, %s212
      %p223 = scmp.eq.s32.totalorder %s25, 0
      %p224 = por %p222, %p223
      %p225 = scmp.ne.s32.totalorder %s211, %s212
      %p226 = scmp.eq.s32.totalorder %s26, 3
      %p227 = por %p225, %p226
      %p229 = scmp.ne.s32.totalorder %s212, %s228
      %p230 = scmp.eq.s32.totalorder %s26, 0
      %p231 = por %p229, %p230
      %p232 = scmp.le.s32.totalorder 1, %s20
      %p233 = scmp.lt.s32.totalorder %s20, 5
      %p234 = pnand %p232, %p233
      %p235 = pneg %p234
      // Predicated region
      $region9: #{tpu_custom_call.1} parent=5 // pred_check
        _
      $region10: #{tpu_custom_call.1} parent=5 // pred_check_branch
        %237 = sbr.rel (%p234) target = $region12
      $region11: #{tpu_custom_call.1} parent=5 // pred_region
        %s238 = ssub.s32 %s20, 1
        // Predicated region
        $region13: #{tpu_custom_call.1} parent=11 // pred_check
          %p239 = pneg %p93
        $region14: #{tpu_custom_call.1} parent=11 // pred_check_branch
          %241 = sbr.rel (%p239) target = $region16
        $region15: #{tpu_custom_call.1} parent=11 // pred_region
          _
        $region16: #{tpu_custom_call.1} parent=11 // pred_fallthru
          _
        // Predicated region
        $region17: #{tpu_custom_call.1} parent=11 // pred_check
          %p242 = pneg %p114
        $region18: #{tpu_custom_call.1} parent=11 // pred_check_branch
          %244 = sbr.rel (%p242) target = $region20
        $region19: #{tpu_custom_call.1} parent=11 // pred_region
          _
        $region20: #{tpu_custom_call.1} parent=11 // pred_fallthru
          _
        // Predicated region
        $region21: #{tpu_custom_call.1} parent=11 // pred_check
          %p245 = pneg %p135
        $region22: #{tpu_custom_call.1} parent=11 // pred_check_branch
          %247 = sbr.rel (%p245) target = $region24
        $region23: #{tpu_custom_call.1} parent=11 // pred_region
          _
        $region24: #{tpu_custom_call.1} parent=11 // pred_fallthru
          _
        // Predicated region
        $region25: #{tpu_custom_call.1} parent=11 // pred_check
          %p248 = pneg %p156
        $region26: #{tpu_custom_call.1} parent=11 // pred_check_branch
          %250 = sbr.rel (%p248) target = $region28
        $region27: #{tpu_custom_call.1} parent=11 // pred_region
          _
        $region28: #{tpu_custom_call.1} parent=11 // pred_fallthru
          _
        // Predicated region
        $region29: #{tpu_custom_call.1} parent=11 // pred_check
          %p251 = pneg %p177
        $region30: #{tpu_custom_call.1} parent=11 // pred_check_branch
          %253 = sbr.rel (%p251) target = $region32
        $region31: #{tpu_custom_call.1} parent=11 // pred_region
          _
        $region32: #{tpu_custom_call.1} parent=11 // pred_fallthru
          _
        // Predicated region
        $region33: #{tpu_custom_call.1} parent=11 // pred_check
          %p254 = pneg %p198
        $region34: #{tpu_custom_call.1} parent=11 // pred_check_branch
          %256 = sbr.rel (%p254) target = $region36
        $region35: #{tpu_custom_call.1} parent=11 // pred_region
          _
        $region36: #{tpu_custom_call.1} parent=11 // pred_fallthru
          _
      $region12: #{tpu_custom_call.1} parent=5 // pred_fallthru
        _
      %p257 = scmp.lt.s32.totalorder %s20, 4
      // Predicated region
      $region37: #{tpu_custom_call.1} parent=5 // pred_check
        %p258 = pneg %p257
      $region38: #{tpu_custom_call.1} parent=5 // pred_check_branch
        %260 = sbr.rel (%p258) target = $region40
      $region39: #{tpu_custom_call.1} parent=5 // pred_region
        // Predicated region
        $region41: #{tpu_custom_call.1} parent=39 // pred_check
          %p261 = pneg %p40
        $region42: #{tpu_custom_call.1} parent=39 // pred_check_branch
          %263 = sbr.rel (%p261) target = $region44
        $region43: #{tpu_custom_call.1} parent=39 // pred_region
          %s264 = sand.u32 %s30, 1
          %s265 = scalar_lea.sflag [#allocation3], %s264
          %s266 = sand.u32 %s30, 1
          %s267 = smul.addr %s266, 128
          %s268 = scalar_lea.vmem [#allocation2], %s267
          %270 = vsyncadd %s265, 0
          %s271 = smul.addr %s20, 16
          %s272 = smul.addr %s271, 8
          %s273 = scalar_lea.hbm %s0, %s272
          %s274 = sshll.u32 %s273, 4
          %s275 = int_to_ptr.hbm [resolvable:$true] %s274
          %s276 = sshll.u32 %s268, 4
          %s277 = int_to_ptr.vmem [resolvable:$true] %s276
          %282 = dma.hbm_to_vmem [thread:$0]  %s275, 2048, %s277, %s265, 128, 128, 8
        $region44: #{tpu_custom_call.1} parent=39 // pred_fallthru
          _
        // Predicated region
        $region45: #{tpu_custom_call.1} parent=39 // pred_check
          %p283 = pneg %p66
        $region46: #{tpu_custom_call.1} parent=39 // pred_check_branch
          %285 = sbr.rel (%p283) target = $region48
        $region47: #{tpu_custom_call.1} parent=39 // pred_region
          %p286 = scmp.lt.s32.totalorder %s20, 3
          %s287 = scalar_select %p286, %s20, 3
          %s288 = smul.addr %s287, 2
          %s289 = scalar_lea.vmem %s1, %s288
        $region48: #{tpu_custom_call.1} parent=39 // pred_fallthru
          _
      $region40: #{tpu_custom_call.1} parent=5 // pred_fallthru
        _
      %p290 = scmp.le.s32.totalorder 1, %s20
      %p291 = scmp.lt.s32.totalorder %s20, 5
      %p292 = pnand %p290, %p291
      %p293 = pneg %p292
      // Predicated region
      $region49: #{tpu_custom_call.1} parent=5 // pred_check
        _
      $region50: #{tpu_custom_call.1} parent=5 // pred_check_branch
        %295 = sbr.rel (%p292) target = $region52
      $region51: #{tpu_custom_call.1} parent=5 // pred_region
        %s296 = ssub.s32 %s20, 1
        %s297 = sand.u32 %s33, 1
        %s298 = scalar_lea.sflag [#allocation3], %s297
        %s299 = sand.u32 %s33, 1
        %s300 = smul.addr %s299, 128
        %s301 = scalar_lea.vmem [#allocation2], %s300
        // Predicated region
        $region53: #{tpu_custom_call.1} parent=51 // pred_check
          %p302 = pneg %p46
        $region54: #{tpu_custom_call.1} parent=51 // pred_check_branch
          %304 = sbr.rel (%p302) target = $region56
        $region55: #{tpu_custom_call.1} parent=51 // pred_region
          %306 = dma.done %s298, 2048
        $region56: #{tpu_custom_call.1} parent=51 // pred_fallthru
          _
        %s307 = sand.u32 %s33, 1
        %s308 = scalar_lea.sflag [#allocation3], %s307
        %s309 = sand.u32 %s33, 1
        %s310 = smul.addr %s309, 128
        %s311 = scalar_lea.vmem [#allocation2], %s310
        %p312 = pneg %p46
        %p313 = pneg %p43
        %p314 = scmp.lt.s32.totalorder %s25, 3
        %s315 = scalar_select %p314, %s25, 3
        %s316 = smul.addr %s315, 2
        %s317 = scalar_lea.vmem %s1, %s316
        %p318 = pneg %p72
        %p319 = pneg %p69
        %p320 = pneg %p93
        %p321 = pneg %p90
        %p322 = pneg %p114
        %p323 = pneg %p111
        %p324 = pneg %p135
        %p325 = pneg %p132
        %p326 = pneg %p156
        %p327 = pneg %p153
        %p328 = pneg %p177
        %p329 = pneg %p174
        %p330 = pneg %p198
        %p331 = pneg %p195
        %p332 = pneg %p224
        %p333 = pneg %p221
        %s334 = sand.u32 %s211, 1
        %s335 = scalar_lea.sflag [#allocation4], %s334
        %s336 = sand.u32 %s211, 1
        %s337 = smul.addr %s336, 2
        %s338 = scalar_lea.vmem [#allocation5], %s337
        %p339 = scmp.lt.s32.totalorder %s25, 3
        %s340 = scalar_select %p339, %s25, 3
        %s341 = smul.addr %s340, 2
        %s342 = scalar_lea.vmem %s1, %s341
        %v343 = vld [vmem:[%s301] sm:$0xff]
        %v344 = vld [vmem:[%s301 + $0x8] sm:$0xff]
        %v345 = vld [vmem:[%s301 + $0x10] sm:$0xff]
        %v346 = vld [vmem:[%s301 + $0x18] sm:$0xff]
        %v347 = vld [vmem:[%s301 + $0x20] sm:$0xff]
        %v348 = vld [vmem:[%s301 + $0x28] sm:$0xff]
        %v349 = vld [vmem:[%s301 + $0x30] sm:$0xff]
        %v350 = vld [vmem:[%s301 + $0x38] sm:$0xff]
        %v351 = vld [vmem:[%s301 + $0x40] sm:$0xff]
        %v352 = vld [vmem:[%s301 + $0x48] sm:$0xff]
        %v353 = vld [vmem:[%s301 + $0x50] sm:$0xff]
        %v354 = vld [vmem:[%s301 + $0x58] sm:$0xff]
        %v355 = vld [vmem:[%s301 + $0x60] sm:$0xff]
        %v356 = vld [vmem:[%s301 + $0x68] sm:$0xff]
        %v357 = vld [vmem:[%s301 + $0x70] sm:$0xff]
        %v358 = vld [vmem:[%s301 + $0x78] sm:$0xff]
        %v359 = vadd.f32 %v343, %v344
        %v360 = vadd.f32 %v359, %v345
        %v361 = vadd.f32 %v360, %v346
        %v362 = vadd.f32 %v361, %v347
        %v363 = vadd.f32 %v362, %v348
        %v364 = vadd.f32 %v363, %v349
        %v365 = vadd.f32 %v364, %v350
        %v366 = vadd.f32 %v365, %v351
        %v367 = vadd.f32 %v366, %v352
        %v368 = vadd.f32 %v367, %v353
        %v369 = vadd.f32 %v368, %v354
        %v370 = vadd.f32 %v369, %v355
        %v371 = vadd.f32 %v370, %v356
        %v372 = vadd.f32 %v371, %v357
        %v373 = vadd.f32 %v372, %v358
        %v374 = vrot.slane %v373, 4
        %v375 = vadd.f32 %v373, %v374
        %v376 = vrot.slane %v375, 2
        %v377 = vadd.f32 %v375, %v376
        %v378 = vrot.slane %v377, 1
        %v379 = vadd.f32 %v377, %v378
        %v380 = vrsqrt.pop %v379
        %v381 = vmul.f32 %v380, %v379
        %v382 = vmul.f32 %v381, %v380
        %v383 = vmul.f32 0.5, %v382
        %v384 = vsub.f32 1.5, %v383
        %v385 = vmul.f32 %v380, %v384
        %vm386 = vweird.f32 %v379
        %vm387 = vweird.f32 %v380
        %vm388 = vmor %vm386, %vm387
        %v389 = vsel %vm388, %v380, %v385
        %v390 = vld [vmem:[%s342] sm:$0x3]
        %v391 = vld [vmem:[%s2] sm:$0xf]
        %393 = vset.pattern.permute.xlu0 0
        %394 = vperm.xlu0 %393, %v391
        %v395 = vpop.permute.xlu0 %394
        %v397 = vperm.slane %v390, 0
        %v398 = vmul.f32 %v395, %v397
        %399 = vset.pattern.permute.xlu0 1
        %400 = vperm.xlu0 %399, %v391
        %v401 = vpop.permute.xlu0 %400
        %v403 = vperm.slane %v390, 1
        %v404 = vmul.f32 %v401, %v403
        %v405 = vadd.f32 %v398, %v404
        %v406 = vmul.f32 %v405, %v389
        %407 = vmatpush.msra.mxu0 %v358
        %408 = vmatpush.msra.mxu0 %v357
        %409 = vmatpush.msra.mxu0 %v356
        %410 = vmatpush.msra.mxu0 %v355
        %411 = vmatpush.msra.mxu0 %v354
        %412 = vmatpush.msra.mxu0 %v353
        %413 = vmatpush.msra.mxu0 %v352
        %414 = vmatpush.msra.mxu0 %v351
        %415 = vmatpush.msra.mxu0 %v350
        %416 = vmatpush.msra.mxu0 %v349
        %417 = vmatpush.msra.mxu0 %v348
        %418 = vmatpush.msra.mxu0 %v347
        %419 = vmatpush.msra.mxu0 %v346
        %420 = vmatpush.msra.mxu0 %v345
        %421 = vmatpush.msra.mxu0 %v344
        %422 = vmatpush.msra.mxu0 %v343
        %423 = vmatmul.f32.gmra.mxu0 %v406
        %v424 = vpop.f32.mrf.mxu0
        %v425 = vadd.f32 0.0, %v424
        %426 = vdwg.mxu0
        %v427 = vmul.f32 %v425, %v389
        %v428 = vld [vmem:[%s3] sm:$0xf]
        %430 = vset.pattern.permute.xlu0 0
        %431 = vperm.xlu0 %430, %v428
        %v432 = vpop.permute.xlu0 %431
        %v434 = vadd.f32 %v427, %v432
        %v435 = vtanh.pop %v434
        %v436 = vld [vmem:[%s4] sm:$0xf]
        %438 = vset.pattern.permute.xlu0 0
        %439 = vperm.xlu0 %438, %v436
        %v440 = vpop.permute.xlu0 %439
        %v442 = vperm.slane %v435, 0
        %v443 = vmul.f32 %v440, %v442
        %444 = vset.pattern.permute.xlu0 1
        %445 = vperm.xlu0 %444, %v436
        %v446 = vpop.permute.xlu0 %445
        %v448 = vperm.slane %v435, 1
        %v449 = vmul.f32 %v446, %v448
        %v450 = vadd.f32 %v443, %v449
        %451 = vset.pattern.permute.xlu0 2
        %452 = vperm.xlu0 %451, %v436
        %v453 = vpop.permute.xlu0 %452
        %v455 = vperm.slane %v435, 2
        %v456 = vmul.f32 %v453, %v455
        %v457 = vadd.f32 %v450, %v456
        %458 = vset.pattern.permute.xlu0 3
        %459 = vperm.xlu0 %458, %v436
        %v460 = vpop.permute.xlu0 %459
        %v462 = vperm.slane %v435, 3
        %v463 = vmul.f32 %v460, %v462
        %v464 = vadd.f32 %v457, %v463
        %v465 = vmul.f32 %v464, %v389
        %466 = vmatpush.msra.mxu0 %v358
        %467 = vmatpush.msra.mxu0 %v357
        %468 = vmatpush.msra.mxu0 %v356
        %469 = vmatpush.msra.mxu0 %v355
        %470 = vmatpush.msra.mxu0 %v354
        %471 = vmatpush.msra.mxu0 %v353
        %472 = vmatpush.msra.mxu0 %v352
        %473 = vmatpush.msra.mxu0 %v351
        %474 = vmatpush.msra.mxu0 %v350
        %475 = vmatpush.msra.mxu0 %v349
        %476 = vmatpush.msra.mxu0 %v348
        %477 = vmatpush.msra.mxu0 %v347
        %478 = vmatpush.msra.mxu0 %v346
        %479 = vmatpush.msra.mxu0 %v345
        %480 = vmatpush.msra.mxu0 %v344
        %481 = vmatpush.msra.mxu0 %v343
        %482 = vmatmul.f32.gmra.mxu0 %v465
        %v483 = vpop.f32.mrf.mxu0
        %v484 = vadd.f32 0.0, %v483
        %485 = vdwg.mxu0
        %v486 = vmul.f32 %v484, %v389
        %v487 = vld [vmem:[%s5] sm:$0xf]
        %489 = vset.pattern.permute.xlu0 0
        %490 = vperm.xlu0 %489, %v487
        %v491 = vpop.permute.xlu0 %490
        %v493 = vadd.f32 %v486, %v491
        %v494 = vtanh.pop %v493
        %v495 = vld [vmem:[%s6] sm:$0x3]
        %497 = vset.pattern.permute.xlu0 0
        %498 = vperm.xlu0 %497, %v495
        %v499 = vpop.permute.xlu0 %498
        %v501 = vperm.slane %v494, 0
        %v502 = vmul.f32 %v499, %v501
        %503 = vset.pattern.permute.xlu0 1
        %504 = vperm.xlu0 %503, %v495
        %v505 = vpop.permute.xlu0 %504
        %v507 = vperm.slane %v494, 1
        %v508 = vmul.f32 %v505, %v507
        %v509 = vadd.f32 %v502, %v508
        %510 = vset.pattern.permute.xlu0 2
        %511 = vperm.xlu0 %510, %v495
        %v512 = vpop.permute.xlu0 %511
        %v514 = vperm.slane %v494, 2
        %v515 = vmul.f32 %v512, %v514
        %v516 = vadd.f32 %v509, %v515
        %517 = vset.pattern.permute.xlu0 3
        %518 = vperm.xlu0 %517, %v495
        %v519 = vpop.permute.xlu0 %518
        %v521 = vperm.slane %v494, 3
        %v522 = vmul.f32 %v519, %v521
        %v523 = vadd.f32 %v516, %v522
        %v524 = vmul.f32 %v523, %v389
        %525 = vmatpush.msra.mxu0 %v358
        %526 = vmatpush.msra.mxu0 %v357
        %527 = vmatpush.msra.mxu0 %v356
        %528 = vmatpush.msra.mxu0 %v355
        %529 = vmatpush.msra.mxu0 %v354
        %530 = vmatpush.msra.mxu0 %v353
        %531 = vmatpush.msra.mxu0 %v352
        %532 = vmatpush.msra.mxu0 %v351
        %533 = vmatpush.msra.mxu0 %v350
        %534 = vmatpush.msra.mxu0 %v349
        %535 = vmatpush.msra.mxu0 %v348
        %536 = vmatpush.msra.mxu0 %v347
        %537 = vmatpush.msra.mxu0 %v346
        %538 = vmatpush.msra.mxu0 %v345
        %539 = vmatpush.msra.mxu0 %v344
        %540 = vmatpush.msra.mxu0 %v343
        %541 = vmatmul.f32.gmra.mxu0 %v524
        %v542 = vpop.f32.mrf.mxu0
        %v543 = vadd.f32 0.0, %v542
        %544 = vdwg.mxu0
        %v545 = vmul.f32 %v543, %v389
        %v546 = vld [vmem:[%s7] sm:$0x3]
        %548 = vset.pattern.permute.xlu0 0
        %549 = vperm.xlu0 %548, %v546
        %v550 = vpop.permute.xlu0 %549
        %v552 = vadd.f32 %v545, %v550
        %553 = vst [vmem:[%s338] sm:$0x3] %v552
        %s554 = sand.u32 %s211, 1
        %s555 = scalar_lea.sflag [#allocation4], %s554
        %s556 = sand.u32 %s211, 1
        %s557 = smul.addr %s556, 2
        %s558 = scalar_lea.vmem [#allocation5], %s557
        // Predicated region
        $region57: #{tpu_custom_call.1} parent=51 // pred_check
          %p559 = pneg %p221
        $region58: #{tpu_custom_call.1} parent=51 // pred_check_branch
          %561 = sbr.rel (%p559) target = $region60
        $region59: #{tpu_custom_call.1} parent=51 // pred_region
          %563 = vsyncadd %s555, 0
          %s564 = smul.addr %s25, 2
          %s565 = scalar_lea.hbm %s8, %s564
          %s567 = sshll.u32 %s558, 4
          %s568 = int_to_ptr.vmem [resolvable:$true] %s567
          %s569 = sshll.u32 %s565, 4
          %s570 = int_to_ptr.hbm [resolvable:$true] %s569
          %572 = dma.vmem_to_hbm [thread:$0]  %s568, 32, %s570, %s555
        $region60: #{tpu_custom_call.1} parent=51 // pred_fallthru
          _
      $region52: #{tpu_custom_call.1} parent=5 // pred_fallthru
        _
      %p573 = scmp.le.s32.totalorder 2, %s20
      // Predicated region
      $region61: #{tpu_custom_call.1} parent=5 // pred_check
        %p574 = pneg %p573
      $region62: #{tpu_custom_call.1} parent=5 // pred_check_branch
        %576 = sbr.rel (%p574) target = $region64
      $region63: #{tpu_custom_call.1} parent=5 // pred_region
        %s577 = ssub.s32 %s20, 2
        // Predicated region
        $region65: #{tpu_custom_call.1} parent=63 // pred_check
          %p578 = pneg %p227
        $region66: #{tpu_custom_call.1} parent=63 // pred_check_branch
          %580 = sbr.rel (%p578) target = $region68
        $region67: #{tpu_custom_call.1} parent=63 // pred_region
          %s581 = sand.u32 %s212, 1
          %s582 = scalar_lea.sflag [#allocation4], %s581
          %s583 = sand.u32 %s212, 1
          %s584 = smul.addr %s583, 2
          %s585 = scalar_lea.vmem [#allocation5], %s584
          %587 = dma.done %s582, 32
        $region68: #{tpu_custom_call.1} parent=63 // pred_fallthru
          _
      $region64: #{tpu_custom_call.1} parent=5 // pred_fallthru
        _
    $region6: #{tpu_custom_call.1} parent=1 // loop_footer
      %s24 = sadd.s32 1, %s20
    $region7: #{tpu_custom_call.1} parent=1 // loop_footer_branch
      %19 = sbr.rel target = $region3
    $region8: #{tpu_custom_call.1} parent=1 // loop_exit
      _
    %588 = vsyncpa [#allocation3], 1
    %s589 = scalar_lea.sflag [#allocation3], 1
    %590 = vsyncpa %s589, 1
    %591 = vsyncpa [#allocation4], 1
    %s592 = scalar_lea.sflag [#allocation4], 1
    %593 = vsyncpa %s592, 1

</llo_original>
